<compile_context>
chip_gen: v7x
topology: tpu7x:2x2x1
jax: 0.10.0
libtpu: 0.0.40
codegen_flags: <defaults>
</compile_context>

<pallas_src>
import functools

import jax
import jax.numpy as jnp
import numpy as np
from jax.experimental import pallas as pl
from jax.experimental.pallas import tpu as pltpu

EPS = 1e-5
LANE = 128


def _ru(n: int) -> int:
    """Round up to the 128-lane tile."""
    return ((n + LANE - 1) // LANE) * LANE


def _r8(n: int) -> int:
    """Round up to the 8-sublane tile."""
    return ((n + 7) // 8) * 8


def _layout(C, L, H, R1, S):
    """Static row/lane layout shared by pack_params and the kernel."""
    LP, RP, SP = _ru(L), _ru(R1), _ru(S)
    GP = _ru(4 * H)                      # gate slab lane width
    WM = max(LP, RP, SP)
    C8, H8 = _r8(C), _r8(H)
    r_w2 = C8                            # w2 needs LP contraction rows (h is LP-wide)
    r_wr1 = r_w2 + LP                    # wr1 needs H rows (h1 is natural H-wide)
    r_wr2 = r_wr1 + H8                   # wr2 needs RP rows (r is RP-wide)
    r_bn = r_wr2 + RP
    mlp_rows = r_bn + 8
    r_whh = LP                           # Wih needs LP rows (nls is LP-wide)
    r_bias = LP + H8                     # Whh needs H rows (h0 is natural H-wide)
    lstm_rows = _r8(r_bias + 1)
    return dict(LP=LP, RP=RP, SP=SP, GP=GP, WM=WM,
                r_w2=r_w2, r_wr1=r_wr1, r_wr2=r_wr2, r_bn=r_bn, mlp_rows=mlp_rows,
                r_whh=r_whh, r_bias=r_bias, lstm_rows=lstm_rows)


def _bn_affine(x, gamma, beta):
    """Training-mode BatchNorm1d as a per-feature affine.

    var = E[x^2] - mu^2 (single pass over x), clamped at 0 to guard against f32
    cancellation; scale/shift live on a (1, N) row, per-element work is one fma.
    Zero-padded columns (gamma = beta = 0) map exactly to 0.
    """
    mu = jnp.mean(x, axis=0, keepdims=True)
    var = jnp.maximum(jnp.mean(x * x, axis=0, keepdims=True) - mu * mu, 0.0)
    scale = gamma * jax.lax.rsqrt(var + EPS)
    shift = beta - mu * scale
    return x * scale + shift


def dynamics_kernel(x_ref, h0_ref, c0_ref, mlp_ref, lstm_ref,
                    nls_ref, h1_ref, c1_ref, vp_ref, *, C, L, H, R1, S):
    lay = _layout(C, L, H, R1, S)
    LP, RP, SP = lay["LP"], lay["RP"], lay["SP"]

    # ---- recurrent half of the LSTM gates FIRST: independent of fc_dynamics, so the
    #      Whh streaming + MXU push overlap the MLP chain (critical-path win) ----
    h0 = h0_ref[...]
    gates_hh = (jnp.dot(h0, lstm_ref[lay["r_whh"]:lay["r_whh"] + H, :],
                        preferred_element_type=jnp.float32)
                + lstm_ref[lay["r_bias"]:lay["r_bias"] + 1, :])

    # all 8 BN parameter rows in one aligned (8, WM) load
    bn = mlp_ref[lay["r_bn"]:lay["r_bn"] + 8, :]

    # ---- fc_dynamics: Linear -> BN -> ReLU -> Linear -> BN (Identity output activation) ----
    # (linear biases omitted: exactly cancelled by training-mode BN mean subtraction)
    h = jnp.dot(x_ref[...], mlp_ref[0:C, 0:LP], preferred_element_type=jnp.float32)
    h = jnp.maximum(_bn_affine(h, bn[0:1, 0:LP], bn[1:2, 0:LP]), 0.0)
    nls = jnp.dot(h, mlp_ref[lay["r_w2"]:lay["r_w2"] + LP, 0:LP],
                  preferred_element_type=jnp.float32)
    nls = _bn_affine(nls, bn[2:3, 0:LP], bn[3:4, 0:LP])

    # ---- single-step LSTM, gates at natural width [i | f | g | o] ----
    gates = jnp.dot(nls, lstm_ref[0:LP, :],
                    preferred_element_type=jnp.float32) + gates_hh
    sig = jax.nn.sigmoid(gates)                 # one EUP stream over the whole gate slab
    i_g = sig[:, 0 * H:1 * H]
    f_g = sig[:, 1 * H:2 * H]
    g_g = 2.0 * sig[:, 2 * H:3 * H] - 1.0       # == tanh(pre-act); pre-act scaled x2 at pack time
    o_g = sig[:, 3 * H:4 * H]
    c1 = f_g * c0_ref[...] + i_g * g_g
    h1 = o_g * jnp.tanh(c1)

    # ---- fc_reward_head: Linear -> BN -> ReLU -> Linear -> BN ----
    r = jnp.dot(h1, mlp_ref[lay["r_wr1"]:lay["r_wr1"] + H, 0:RP],
                preferred_element_type=jnp.float32)
    r = jnp.maximum(_bn_affine(r, bn[4:5, 0:RP], bn[5:6, 0:RP]), 0.0)
    vp = jnp.dot(r, mlp_ref[lay["r_wr2"]:lay["r_wr2"] + RP, 0:SP],
                 preferred_element_type=jnp.float32)
    vp = _bn_affine(vp, bn[6:7, 0:SP], bn[7:8, 0:SP])

    # ---- four natural-shape outputs (no wrapper-side slicing) ----
    nls_ref[...] = nls[:, 0:L]
    h1_ref[...] = h1
    c1_ref[...] = c1
    vp_ref[...] = vp[:, 0:S]


def pack_params(p, C, L, H, R1, S):
    """Pack all parameters into two lane-dense f32 blobs (done once, reused every call)."""
    lay = _layout(C, L, H, R1, S)

    # --- MLP blob: w1 | w2 | wr1 | wr2 stacked on the sublane axis + 8 BN rows ---
    mlp = jnp.zeros((lay["mlp_rows"], lay["WM"]), jnp.float32)
    mlp = mlp.at[0:C, 0:L].set(p["w1"])
    mlp = mlp.at[lay["r_w2"]:lay["r_w2"] + L, 0:L].set(p["w2"])
    mlp = mlp.at[lay["r_wr1"]:lay["r_wr1"] + H, 0:R1].set(p["wr1"])
    mlp = mlp.at[lay["r_wr2"]:lay["r_wr2"] + R1, 0:S].set(p["wr2"])
    rb = lay["r_bn"]
    mlp = mlp.at[rb + 0, 0:L].set(p["g1"][0])
    mlp = mlp.at[rb + 1, 0:L].set(p["be1"][0])
    mlp = mlp.at[rb + 2, 0:L].set(p["g2"][0])
    mlp = mlp.at[rb + 3, 0:L].set(p["be2"][0])
    mlp = mlp.at[rb + 4, 0:R1].set(p["gr1"][0])
    mlp = mlp.at[rb + 5, 0:R1].set(p["ber1"][0])
    mlp = mlp.at[rb + 6, 0:S].set(p["gr2"][0])
    mlp = mlp.at[rb + 7, 0:S].set(p["ber2"][0])

    # --- LSTM blob: [Wih ; Whh ; bias] at natural gate width.  The g-gate columns are
    #     pre-scaled by 2 so tanh can be recovered from a single whole-slab sigmoid. ---
    gscale = jnp.ones((1, 4 * H), jnp.float32).at[:, 2 * H:3 * H].set(2.0)
    lstm = jnp.zeros((lay["lstm_rows"], lay["GP"]), jnp.float32)
    lstm = lstm.at[0:L, 0:4 * H].set(p["wih"] * gscale)
    lstm = lstm.at[lay["r_whh"]:lay["r_whh"] + H, 0:4 * H].set(p["whh"] * gscale)
    lstm = lstm.at[lay["r_bias"], 0:4 * H].set(((p["bih"] + p["bhh"]) * gscale)[0])
    return mlp, lstm


@functools.partial(jax.jit, static_argnames=("C", "L", "H", "R1", "S"))
def dynamics_forward(x, h0, c0, mlp_blob, lstm_blob, *, C, L, H, R1, S):
    B = x.shape[0]
    kernel = functools.partial(dynamics_kernel, C=C, L=L, H=H, R1=R1, S=S)
    vmem = pl.BlockSpec(memory_space=pltpu.MemorySpace.VMEM)
    nls, h1, c1, vp = pl.pallas_call(
        kernel,
        out_shape=(jax.ShapeDtypeStruct((B, L), jnp.float32),
                   jax.ShapeDtypeStruct((B, H), jnp.float32),
                   jax.ShapeDtypeStruct((B, H), jnp.float32),
                   jax.ShapeDtypeStruct((B, S), jnp.float32)),
        in_specs=[vmem, vmem, vmem, vmem, vmem],
        out_specs=(vmem, vmem, vmem, vmem),
        # actual footprint is well under 1 MiB; 8 MiB keeps plenty of headroom on every chip
        compiler_params=pltpu.CompilerParams(vmem_limit_bytes=8 * 1024 * 1024),
    )(x.astype(jnp.float32), h0.astype(jnp.float32), c0.astype(jnp.float32),
      mlp_blob, lstm_blob)
    # match torch nn.LSTM hidden-state layout (num_layers=1, B, H)
    return nls, (h1[None, :, :], c1[None, :, :]), vp


def reference_forward(x, h0, c0, p):
    """Pure-JAX reference with canonical train-mode BN math, for the correctness check."""
    def bn(v, g, b):
        mu = jnp.mean(v, axis=0, keepdims=True)
        var = jnp.mean((v - mu) ** 2, axis=0, keepdims=True)
        return g * (v - mu) * jax.lax.rsqrt(var + EPS) + b

    h = jnp.maximum(bn(x @ p["w1"], p["g1"], p["be1"]), 0.0)
    nls = bn(h @ p["w2"], p["g2"], p["be2"])
    H = h0.shape[1]
    gates = nls @ p["wih"] + p["bih"] + h0 @ p["whh"] + p["bhh"]
    i_g = jax.nn.sigmoid(gates[:, 0 * H:1 * H])
    f_g = jax.nn.sigmoid(gates[:, 1 * H:2 * H])
    g_g = jnp.tanh(gates[:, 2 * H:3 * H])
    o_g = jax.nn.sigmoid(gates[:, 3 * H:4 * H])
    c1 = f_g * c0 + i_g * g_g
    h1 = o_g * jnp.tanh(c1)
    r = jnp.maximum(bn(h1 @ p["wr1"], p["gr1"], p["ber1"]), 0.0)
    vp = bn(r @ p["wr2"], p["gr2"], p["ber2"])
    return nls, h1, c1, vp


def init_params(key, C, L, H, R1, S):
    ks = jax.random.split(key, 16)
    f32 = jnp.float32

    def w(k, fi, fo, scale=0.05):
        return scale * jax.random.normal(k, (fi, fo), f32)

    def bn_par(kg, kb, n):
        # randomized gamma/beta (torch default is 1/0) to exercise the packed affine path
        return (1.0 + 0.1 * jax.random.normal(kg, (1, n), f32),
                0.1 * jax.random.normal(kb, (1, n), f32))

    p = {}
    # fc_dynamics — linear biases omitted: a bias immediately followed by training-mode BN
    # is exactly cancelled by the mean subtraction, so the forward is unchanged.
    p["w1"] = w(ks[0], C, L)
    p["g1"], p["be1"] = bn_par(ks[1], ks[2], L)
    # NOTE: last_linear_layer_init_zero=True in the torch module would zero w2/wr2;
    # random init is used here to keep the numeric path non-trivial for the check.
    p["w2"] = w(ks[3], L, L)
    p["g2"], p["be2"] = bn_par(ks[4], ks[5], L)
    # lstm (gate order i, f, g, o), weights stored transposed for x @ W
    p["wih"] = w(ks[6], L, 4 * H)
    p["whh"] = w(ks[7], H, 4 * H)
    p["bih"] = 0.05 * jax.random.normal(ks[8], (1, 4 * H), f32)
    p["bhh"] = 0.05 * jax.random.normal(ks[9], (1, 4 * H), f32)
    # fc_reward_head
    p["wr1"] = w(ks[10], H, R1)
    p["gr1"], p["ber1"] = bn_par(ks[11], ks[12], R1)
    p["wr2"] = w(ks[13], R1, S)
    p["gr2"], p["ber2"] = bn_par(ks[14], ks[15], S)
    return p


if __name__ == "__main__":
    # small shapes consistent with the module
    B = 8
    action_space_size = 2
    num_channels = 32
    latent_state_dim = num_channels - action_space_size   # 30
    lstm_hidden_size = 64
    fc_reward_hidden = 32
    output_support_size = 61

    key = jax.random.PRNGKey(0)
    kx, kh, kc, kp = jax.random.split(key, 4)
    x = jax.random.normal(kx, (B, num_channels), jnp.float32)        # state_action_encoding
    h0 = jax.random.normal(kh, (B, lstm_hidden_size), jnp.float32)   # reward_hidden_state[0]
    c0 = jax.random.normal(kc, (B, lstm_hidden_size), jnp.float32)   # reward_hidden_state[1]

    params = init_params(kp, num_channels, latent_state_dim, lstm_hidden_size,
                         fc_reward_hidden, output_support_size)
    mlp_blob, lstm_blob = pack_params(params, num_channels, latent_state_dim,
                                      lstm_hidden_size, fc_reward_hidden,
                                      output_support_size)

    next_latent_state, (h1, c1), value_prefix = dynamics_forward(
        x, h0, c0, mlp_blob, lstm_blob,
        C=num_channels, L=latent_state_dim, H=lstm_hidden_size,
        R1=fc_reward_hidden, S=output_support_size)
    jax.block_until_ready((next_latent_state, h1, c1, value_prefix))

    # correctness check against a pure-JAX reference (canonical BN formula, real tanh)
    nls_r, h1_r, c1_r, vp_r = reference_forward(x, h0, c0, params)
    np.testing.assert_allclose(np.asarray(next_latent_state), np.asarray(nls_r), rtol=2e-4, atol=2e-5)
    np.testing.assert_allclose(np.asarray(h1[0]), np.asarray(h1_r), rtol=2e-4, atol=2e-5)
    np.testing.assert_allclose(np.asarray(c1[0]), np.asarray(c1_r), rtol=2e-4, atol=2e-5)
    np.testing.assert_allclose(np.asarray(value_prefix), np.asarray(vp_r), rtol=2e-4, atol=2e-5)

    assert next_latent_state.shape == (B, latent_state_dim)
    assert h1.shape == (1, B, lstm_hidden_size) and c1.shape == (1, B, lstm_hidden_size)
    assert value_prefix.shape == (B, output_support_size)
    print("KERNEL_OK")
</pallas_src>

<mosaic_0001>
module attributes {stable_mosaic.version = 11 : i64} {
  func.func @dynamics_kernel(%arg0: memref<8x32xf32, #tpu.memory_space<vmem>>, %arg1: memref<8x64xf32, #tpu.memory_space<vmem>>, %arg2: memref<8x64xf32, #tpu.memory_space<vmem>>, %arg3: memref<360x128xf32, #tpu.memory_space<vmem>>, %arg4: memref<200x256xf32, #tpu.memory_space<vmem>>, %arg5: memref<8x30xf32, #tpu.memory_space<vmem>>, %arg6: memref<8x64xf32, #tpu.memory_space<vmem>>, %arg7: memref<8x64xf32, #tpu.memory_space<vmem>>, %arg8: memref<8x61xf32, #tpu.memory_space<vmem>>) attributes {dimension_semantics = [], scalar_prefetch = 0 : i64, scratch_operands = 0 : i64, tpu.core_type = #tpu.core_type<tc>} {
    %c0 = arith.constant 0 : index
    %c0_0 = arith.constant 0 : index
    %0 = vector.load %arg1[%c0, %c0_0] : memref<8x64xf32, #tpu.memory_space<vmem>>, vector<8x64xf32>
    %c128 = arith.constant 128 : index
    %c0_1 = arith.constant 0 : index
    %1 = vector.load %arg4[%c128, %c0_1] : memref<200x256xf32, #tpu.memory_space<vmem>>, vector<64x256xf32>
    %cst = arith.constant dense<0.000000e+00> : vector<8x256xf32>
    %2 = tpu.matmul %0, %1, %cst {dimension_numbers = #tpu.dot_dimension_numbers<[1], [0], [0], [1], [0, 0, 1, 1], [], []>} : vector<8x64xf32>, vector<64x256xf32>, vector<8x256xf32> -> vector<8x256xf32>
    %c192 = arith.constant 192 : index
    %c0_2 = arith.constant 0 : index
    %3 = vector.load %arg4[%c192, %c0_2] : memref<200x256xf32, #tpu.memory_space<vmem>>, vector<1x256xf32>
    %4 = vector.broadcast %3 : vector<1x256xf32> to vector<8x256xf32>
    %5 = arith.addf %2, %4 : vector<8x256xf32>
    %c352 = arith.constant 352 : index
    %c0_3 = arith.constant 0 : index
    %6 = vector.load %arg3[%c352, %c0_3] : memref<360x128xf32, #tpu.memory_space<vmem>>, vector<8x128xf32>
    %c0_4 = arith.constant 0 : index
    %c0_5 = arith.constant 0 : index
    %7 = vector.load %arg0[%c0_4, %c0_5] : memref<8x32xf32, #tpu.memory_space<vmem>>, vector<8x32xf32>
    %c0_6 = arith.constant 0 : index
    %c0_7 = arith.constant 0 : index
    %8 = vector.load %arg3[%c0_6, %c0_7] : memref<360x128xf32, #tpu.memory_space<vmem>>, vector<32x128xf32>
    %cst_8 = arith.constant dense<0.000000e+00> : vector<8x128xf32>
    %9 = tpu.matmul %7, %8, %cst_8 {dimension_numbers = #tpu.dot_dimension_numbers<[1], [0], [0], [1], [0, 0, 1, 1], [], []>} : vector<8x32xf32>, vector<32x128xf32>, vector<8x128xf32> -> vector<8x128xf32>
    %10 = vector.extract_strided_slice %6 {offsets = [0, 0], sizes = [1, 128], strides = [1, 1]} : vector<8x128xf32> to vector<1x128xf32>
    %11 = vector.extract_strided_slice %6 {offsets = [1, 0], sizes = [1, 128], strides = [1, 1]} : vector<8x128xf32> to vector<1x128xf32>
    %cst_9 = arith.constant dense<0.000000e+00> : vector<128xf32>
    %12 = vector.multi_reduction <add>, %9, %cst_9 [0] : vector<8x128xf32> to vector<128xf32>
    %13 = vector.shape_cast %12 : vector<128xf32> to vector<1x128xf32>
    %cst_10 = arith.constant 8.000000e+00 : f32
    %14 = vector.broadcast %cst_10 : f32 to vector<1x128xf32>
    %15 = arith.divf %13, %14 : vector<1x128xf32>
    %16 = arith.mulf %9, %9 : vector<8x128xf32>
    %cst_11 = arith.constant dense<0.000000e+00> : vector<128xf32>
    %17 = vector.multi_reduction <add>, %16, %cst_11 [0] : vector<8x128xf32> to vector<128xf32>
    %18 = vector.shape_cast %17 : vector<128xf32> to vector<1x128xf32>
    %cst_12 = arith.constant 8.000000e+00 : f32
    %19 = vector.broadcast %cst_12 : f32 to vector<1x128xf32>
    %20 = arith.divf %18, %19 : vector<1x128xf32>
    %21 = arith.mulf %15, %15 : vector<1x128xf32>
    %22 = arith.subf %20, %21 : vector<1x128xf32>
    %cst_13 = arith.constant 0.000000e+00 : f32
    %23 = vector.broadcast %cst_13 : f32 to vector<1x128xf32>
    %24 = arith.maximumf %22, %23 : vector<1x128xf32>
    %cst_14 = arith.constant 9.99999974E-6 : f32
    %25 = vector.broadcast %cst_14 : f32 to vector<1x128xf32>
    %26 = arith.addf %24, %25 : vector<1x128xf32>
    %27 = math.rsqrt %26 : vector<1x128xf32>
    %28 = arith.mulf %10, %27 : vector<1x128xf32>
    %29 = arith.mulf %15, %28 : vector<1x128xf32>
    %30 = arith.subf %11, %29 : vector<1x128xf32>
    %31 = vector.broadcast %28 : vector<1x128xf32> to vector<8x128xf32>
    %32 = arith.mulf %9, %31 : vector<8x128xf32>
    %33 = vector.broadcast %30 : vector<1x128xf32> to vector<8x128xf32>
    %34 = arith.addf %32, %33 : vector<8x128xf32>
    %cst_15 = arith.constant 0.000000e+00 : f32
    %35 = vector.broadcast %cst_15 : f32 to vector<8x128xf32>
    %36 = arith.maximumf %34, %35 : vector<8x128xf32>
    %c32 = arith.constant 32 : index
    %c0_16 = arith.constant 0 : index
    %37 = vector.load %arg3[%c32, %c0_16] : memref<360x128xf32, #tpu.memory_space<vmem>>, vector<128x128xf32>
    %cst_17 = arith.constant dense<0.000000e+00> : vector<8x128xf32>
    %38 = tpu.matmul %36, %37, %cst_17 {dimension_numbers = #tpu.dot_dimension_numbers<[1], [0], [0], [1], [0, 0, 1, 1], [], []>} : vector<8x128xf32>, vector<128x128xf32>, vector<8x128xf32> -> vector<8x128xf32>
    %39 = vector.extract_strided_slice %6 {offsets = [2, 0], sizes = [1, 128], strides = [1, 1]} : vector<8x128xf32> to vector<1x128xf32>
    %40 = vector.extract_strided_slice %6 {offsets = [3, 0], sizes = [1, 128], strides = [1, 1]} : vector<8x128xf32> to vector<1x128xf32>
    %cst_18 = arith.constant dense<0.000000e+00> : vector<128xf32>
    %41 = vector.multi_reduction <add>, %38, %cst_18 [0] : vector<8x128xf32> to vector<128xf32>
    %42 = vector.shape_cast %41 : vector<128xf32> to vector<1x128xf32>
    %cst_19 = arith.constant 8.000000e+00 : f32
    %43 = vector.broadcast %cst_19 : f32 to vector<1x128xf32>
    %44 = arith.divf %42, %43 : vector<1x128xf32>
    %45 = arith.mulf %38, %38 : vector<8x128xf32>
    %cst_20 = arith.constant dense<0.000000e+00> : vector<128xf32>
    %46 = vector.multi_reduction <add>, %45, %cst_20 [0] : vector<8x128xf32> to vector<128xf32>
    %47 = vector.shape_cast %46 : vector<128xf32> to vector<1x128xf32>
    %cst_21 = arith.constant 8.000000e+00 : f32
    %48 = vector.broadcast %cst_21 : f32 to vector<1x128xf32>
    %49 = arith.divf %47, %48 : vector<1x128xf32>
    %50 = arith.mulf %44, %44 : vector<1x128xf32>
    %51 = arith.subf %49, %50 : vector<1x128xf32>
    %cst_22 = arith.constant 0.000000e+00 : f32
    %52 = vector.broadcast %cst_22 : f32 to vector<1x128xf32>
    %53 = arith.maximumf %51, %52 : vector<1x128xf32>
    %cst_23 = arith.constant 9.99999974E-6 : f32
    %54 = vector.broadcast %cst_23 : f32 to vector<1x128xf32>
    %55 = arith.addf %53, %54 : vector<1x128xf32>
    %56 = math.rsqrt %55 : vector<1x128xf32>
    %57 = arith.mulf %39, %56 : vector<1x128xf32>
    %58 = arith.mulf %44, %57 : vector<1x128xf32>
    %59 = arith.subf %40, %58 : vector<1x128xf32>
    %60 = vector.broadcast %57 : vector<1x128xf32> to vector<8x128xf32>
    %61 = arith.mulf %38, %60 : vector<8x128xf32>
    %62 = vector.broadcast %59 : vector<1x128xf32> to vector<8x128xf32>
    %63 = arith.addf %61, %62 : vector<8x128xf32>
    %c0_24 = arith.constant 0 : index
    %c0_25 = arith.constant 0 : index
    %64 = vector.load %arg4[%c0_24, %c0_25] : memref<200x256xf32, #tpu.memory_space<vmem>>, vector<128x256xf32>
    %cst_26 = arith.constant dense<0.000000e+00> : vector<8x256xf32>
    %65 = tpu.matmul %63, %64, %cst_26 {dimension_numbers = #tpu.dot_dimension_numbers<[1], [0], [0], [1], [0, 0, 1, 1], [], []>} : vector<8x128xf32>, vector<128x256xf32>, vector<8x256xf32> -> vector<8x256xf32>
    %66 = arith.addf %65, %5 : vector<8x256xf32>
    %67 = arith.negf %66 : vector<8x256xf32>
    %68 = math.exp %67 : vector<8x256xf32>
    %cst_27 = arith.constant 1.000000e+00 : f32
    %69 = vector.broadcast %cst_27 : f32 to vector<8x256xf32>
    %70 = arith.addf %69, %68 : vector<8x256xf32>
    %71 = arith.divf %69, %70 : vector<8x256xf32>
    %72 = vector.extract_strided_slice %71 {offsets = [0, 0], sizes = [8, 64], strides = [1, 1]} : vector<8x256xf32> to vector<8x64xf32>
    %73 = vector.extract_strided_slice %71 {offsets = [0, 64], sizes = [8, 64], strides = [1, 1]} : vector<8x256xf32> to vector<8x64xf32>
    %74 = vector.extract_strided_slice %71 {offsets = [0, 128], sizes = [8, 64], strides = [1, 1]} : vector<8x256xf32> to vector<8x64xf32>
    %cst_28 = arith.constant 2.000000e+00 : f32
    %75 = vector.broadcast %cst_28 : f32 to vector<8x64xf32>
    %76 = arith.mulf %75, %74 : vector<8x64xf32>
    %cst_29 = arith.constant 1.000000e+00 : f32
    %77 = vector.broadcast %cst_29 : f32 to vector<8x64xf32>
    %78 = arith.subf %76, %77 : vector<8x64xf32>
    %79 = vector.extract_strided_slice %71 {offsets = [0, 192], sizes = [8, 64], strides = [1, 1]} : vector<8x256xf32> to vector<8x64xf32>
    %c0_30 = arith.constant 0 : index
    %c0_31 = arith.constant 0 : index
    %80 = vector.load %arg2[%c0_30, %c0_31] : memref<8x64xf32, #tpu.memory_space<vmem>>, vector<8x64xf32>
    %81 = arith.mulf %73, %80 : vector<8x64xf32>
    %82 = arith.mulf %72, %78 : vector<8x64xf32>
    %83 = arith.addf %81, %82 : vector<8x64xf32>
    %84 = math.tanh %83 : vector<8x64xf32>
    %85 = arith.mulf %79, %84 : vector<8x64xf32>
    %c160 = arith.constant 160 : index
    %c0_32 = arith.constant 0 : index
    %86 = vector.load %arg3[%c160, %c0_32] : memref<360x128xf32, #tpu.memory_space<vmem>>, vector<64x128xf32>
    %cst_33 = arith.constant dense<0.000000e+00> : vector<8x128xf32>
    %87 = tpu.matmul %85, %86, %cst_33 {dimension_numbers = #tpu.dot_dimension_numbers<[1], [0], [0], [1], [0, 0, 1, 1], [], []>} : vector<8x64xf32>, vector<64x128xf32>, vector<8x128xf32> -> vector<8x128xf32>
    %88 = vector.extract_strided_slice %6 {offsets = [4, 0], sizes = [1, 128], strides = [1, 1]} : vector<8x128xf32> to vector<1x128xf32>
    %89 = vector.extract_strided_slice %6 {offsets = [5, 0], sizes = [1, 128], strides = [1, 1]} : vector<8x128xf32> to vector<1x128xf32>
    %cst_34 = arith.constant dense<0.000000e+00> : vector<128xf32>
    %90 = vector.multi_reduction <add>, %87, %cst_34 [0] : vector<8x128xf32> to vector<128xf32>
    %91 = vector.shape_cast %90 : vector<128xf32> to vector<1x128xf32>
    %cst_35 = arith.constant 8.000000e+00 : f32
    %92 = vector.broadcast %cst_35 : f32 to vector<1x128xf32>
    %93 = arith.divf %91, %92 : vector<1x128xf32>
    %94 = arith.mulf %87, %87 : vector<8x128xf32>
    %cst_36 = arith.constant dense<0.000000e+00> : vector<128xf32>
    %95 = vector.multi_reduction <add>, %94, %cst_36 [0] : vector<8x128xf32> to vector<128xf32>
    %96 = vector.shape_cast %95 : vector<128xf32> to vector<1x128xf32>
    %cst_37 = arith.constant 8.000000e+00 : f32
    %97 = vector.broadcast %cst_37 : f32 to vector<1x128xf32>
    %98 = arith.divf %96, %97 : vector<1x128xf32>
    %99 = arith.mulf %93, %93 : vector<1x128xf32>
    %100 = arith.subf %98, %99 : vector<1x128xf32>
    %cst_38 = arith.constant 0.000000e+00 : f32
    %101 = vector.broadcast %cst_38 : f32 to vector<1x128xf32>
    %102 = arith.maximumf %100, %101 : vector<1x128xf32>
    %cst_39 = arith.constant 9.99999974E-6 : f32
    %103 = vector.broadcast %cst_39 : f32 to vector<1x128xf32>
    %104 = arith.addf %102, %103 : vector<1x128xf32>
    %105 = math.rsqrt %104 : vector<1x128xf32>
    %106 = arith.mulf %88, %105 : vector<1x128xf32>
    %107 = arith.mulf %93, %106 : vector<1x128xf32>
    %108 = arith.subf %89, %107 : vector<1x128xf32>
    %109 = vector.broadcast %106 : vector<1x128xf32> to vector<8x128xf32>
    %110 = arith.mulf %87, %109 : vector<8x128xf32>
    %111 = vector.broadcast %108 : vector<1x128xf32> to vector<8x128xf32>
    %112 = arith.addf %110, %111 : vector<8x128xf32>
    %cst_40 = arith.constant 0.000000e+00 : f32
    %113 = vector.broadcast %cst_40 : f32 to vector<8x128xf32>
    %114 = arith.maximumf %112, %113 : vector<8x128xf32>
    %c224 = arith.constant 224 : index
    %c0_41 = arith.constant 0 : index
    %115 = vector.load %arg3[%c224, %c0_41] : memref<360x128xf32, #tpu.memory_space<vmem>>, vector<128x128xf32>
    %cst_42 = arith.constant dense<0.000000e+00> : vector<8x128xf32>
    %116 = tpu.matmul %114, %115, %cst_42 {dimension_numbers = #tpu.dot_dimension_numbers<[1], [0], [0], [1], [0, 0, 1, 1], [], []>} : vector<8x128xf32>, vector<128x128xf32>, vector<8x128xf32> -> vector<8x128xf32>
    %117 = vector.extract_strided_slice %6 {offsets = [6, 0], sizes = [1, 128], strides = [1, 1]} : vector<8x128xf32> to vector<1x128xf32>
    %118 = vector.extract_strided_slice %6 {offsets = [7, 0], sizes = [1, 128], strides = [1, 1]} : vector<8x128xf32> to vector<1x128xf32>
    %cst_43 = arith.constant dense<0.000000e+00> : vector<128xf32>
    %119 = vector.multi_reduction <add>, %116, %cst_43 [0] : vector<8x128xf32> to vector<128xf32>
    %120 = vector.shape_cast %119 : vector<128xf32> to vector<1x128xf32>
    %cst_44 = arith.constant 8.000000e+00 : f32
    %121 = vector.broadcast %cst_44 : f32 to vector<1x128xf32>
    %122 = arith.divf %120, %121 : vector<1x128xf32>
    %123 = arith.mulf %116, %116 : vector<8x128xf32>
    %cst_45 = arith.constant dense<0.000000e+00> : vector<128xf32>
    %124 = vector.multi_reduction <add>, %123, %cst_45 [0] : vector<8x128xf32> to vector<128xf32>
    %125 = vector.shape_cast %124 : vector<128xf32> to vector<1x128xf32>
    %cst_46 = arith.constant 8.000000e+00 : f32
    %126 = vector.broadcast %cst_46 : f32 to vector<1x128xf32>
    %127 = arith.divf %125, %126 : vector<1x128xf32>
    %128 = arith.mulf %122, %122 : vector<1x128xf32>
    %129 = arith.subf %127, %128 : vector<1x128xf32>
    %cst_47 = arith.constant 0.000000e+00 : f32
    %130 = vector.broadcast %cst_47 : f32 to vector<1x128xf32>
    %131 = arith.maximumf %129, %130 : vector<1x128xf32>
    %cst_48 = arith.constant 9.99999974E-6 : f32
    %132 = vector.broadcast %cst_48 : f32 to vector<1x128xf32>
    %133 = arith.addf %131, %132 : vector<1x128xf32>
    %134 = math.rsqrt %133 : vector<1x128xf32>
    %135 = arith.mulf %117, %134 : vector<1x128xf32>
    %136 = arith.mulf %122, %135 : vector<1x128xf32>
    %137 = arith.subf %118, %136 : vector<1x128xf32>
    %138 = vector.broadcast %135 : vector<1x128xf32> to vector<8x128xf32>
    %139 = arith.mulf %116, %138 : vector<8x128xf32>
    %140 = vector.broadcast %137 : vector<1x128xf32> to vector<8x128xf32>
    %141 = arith.addf %139, %140 : vector<8x128xf32>
    %142 = vector.extract_strided_slice %63 {offsets = [0, 0], sizes = [8, 30], strides = [1, 1]} : vector<8x128xf32> to vector<8x30xf32>
    %c0_49 = arith.constant 0 : index
    %c0_50 = arith.constant 0 : index
    %143 = vector.load %arg5[%c0_49, %c0_50] : memref<8x30xf32, #tpu.memory_space<vmem>>, vector<8x30xf32>
    tpu.vector_store %arg5[%c0_49, %c0_50], %142 {strides = array<i32>} : memref<8x30xf32, #tpu.memory_space<vmem>>, vector<8x30xf32>,
    %c0_51 = arith.constant 0 : index
    %c0_52 = arith.constant 0 : index
    %144 = vector.load %arg6[%c0_51, %c0_52] : memref<8x64xf32, #tpu.memory_space<vmem>>, vector<8x64xf32>
    tpu.vector_store %arg6[%c0_51, %c0_52], %85 {strides = array<i32>} : memref<8x64xf32, #tpu.memory_space<vmem>>, vector<8x64xf32>,
    %c0_53 = arith.constant 0 : index
    %c0_54 = arith.constant 0 : index
    %145 = vector.load %arg7[%c0_53, %c0_54] : memref<8x64xf32, #tpu.memory_space<vmem>>, vector<8x64xf32>
    tpu.vector_store %arg7[%c0_53, %c0_54], %83 {strides = array<i32>} : memref<8x64xf32, #tpu.memory_space<vmem>>, vector<8x64xf32>,
    %146 = vector.extract_strided_slice %141 {offsets = [0, 0], sizes = [8, 61], strides = [1, 1]} : vector<8x128xf32> to vector<8x61xf32>
    %c0_55 = arith.constant 0 : index
    %c0_56 = arith.constant 0 : index
    %147 = vector.load %arg8[%c0_55, %c0_56] : memref<8x61xf32, #tpu.memory_space<vmem>>, vector<8x61xf32>
    tpu.vector_store %arg8[%c0_55, %c0_56], %146 {strides = array<i32>} : memref<8x61xf32, #tpu.memory_space<vmem>>, vector<8x61xf32>,
    return
  }
}

</mosaic_0001>

<llo_original>
// kernel: dynamics_forward.1
$region0: #{dynamics_forward.1}
  #allocation0 [shape = 'u32[]', space=smem, size = 0x4, offset = 0x4, fixed_abs, tag = 'smem constant byte address 0x4 - core index']
  #allocation1 [shape = 'u32[144,128]{1,0:T(1,128)}', space=vmem, size = 0x12000, scoped, tag = 'internal scratch']
  %s0 = inlined_call_operand.hbm [shape: f32[8,32], index: 0, kind: input, shape index: {}]
  %s1 = inlined_call_operand.hbm [shape: f32[8,64], index: 1, kind: input, shape index: {}]
  %s2 = inlined_call_operand.hbm [shape: f32[8,64], index: 2, kind: input, shape index: {}]
  %s3 = inlined_call_operand.hbm [shape: f32[360,128], index: 3, kind: input, shape index: {}]
  %s4 = inlined_call_operand.hbm [shape: f32[200,256], index: 4, kind: input, shape index: {}]
  %s5 = inlined_call_operand.hbm [shape: f32[8,30], index: 5, kind: output, shape index: {0}]
  %s6 = inlined_call_operand.hbm [shape: f32[8,64], index: 6, kind: output, shape index: {1}]
  %s7 = inlined_call_operand.hbm [shape: f32[8,64], index: 7, kind: output, shape index: {2}]
  %s8 = inlined_call_operand.hbm [shape: f32[8,61], index: 8, kind: output, shape index: {3}]
  %9 = xla_tuple %s5, %s6, %s7, %s8
  %s10 = sld [smem:[#allocation0]]
  $region74: #{dynamics_forward.1} parent=0
    _
  %s12 = ssub.s32 1, %s10
  %s13 = scalar_select 0, %s12, %s10
  $region1: #{dynamics_forward.1} parent=0
    #allocation2 [shape = 'u8[4096]{0}', space=vmem, size = 0x1000, scoped, tag = 'input window, operand 0, single buffered']
    #allocation3 [shape = 's32[1]{0}', space=sflag, size = 0x4, scoped, tag = 'scoped memory for dynamics_forward.1']
    #allocation4 [shape = 's32[1]{0}', space=sflag, size = 0x4, scoped, tag = 'scoped memory for dynamics_forward.1']
    #allocation5 [shape = 'u8[4096]{0}', space=vmem, size = 0x1000, scoped, tag = 'input window, operand 1, single buffered']
    #allocation6 [shape = 's32[1]{0}', space=sflag, size = 0x4, scoped, tag = 'scoped memory for dynamics_forward.1']
    #allocation7 [shape = 'u8[4096]{0}', space=vmem, size = 0x1000, scoped, tag = 'input window, operand 2, single buffered']
    #allocation8 [shape = 'u8[184320]{0}', space=vmem, size = 0x2d000, scoped, tag = 'input window, operand 3, single buffered']
    #allocation9 [shape = 's32[1]{0}', space=sflag, size = 0x4, scoped, tag = 'scoped memory for dynamics_forward.1']
    #allocation10 [shape = 'u8[204800]{0}', space=vmem, size = 0x32000, scoped, tag = 'input window, operand 4, single buffered']
    #allocation11 [shape = 'u8[4096]{0}', space=vmem, size = 0x1000, scoped, tag = 'output window, operand 0, single buffered']
    #allocation12 [shape = 'u8[4096]{0}', space=vmem, size = 0x1000, scoped, tag = 'output window, operand 1, single buffered']
    #allocation13 [shape = 's32[1]{0}', space=sflag, size = 0x4, scoped, tag = 'scoped memory for dynamics_forward.1']
    #allocation14 [shape = 'u8[4096]{0}', space=vmem, size = 0x1000, scoped, tag = 'output window, operand 2, single buffered']
    #allocation15 [shape = 'u8[4096]{0}', space=vmem, size = 0x1000, scoped, tag = 'output window, operand 3, single buffered']
    #allocation16 [shape = 's32[1]{0}', space=sflag, size = 0x4, scoped, tag = 'scoped memory for dynamics_forward.1']
    %14 = vsyncpa [#allocation3], 0
    %15 = vsyncpa [#allocation6], 0
    %16 = vsyncpa [#allocation9], 0
    %17 = vsyncpa [#allocation4], 0
    %18 = vsyncpa [#allocation13], 0
    %19 = vsyncpa [#allocation16], 0
    // Predicated region
    $region2: #{dynamics_forward.1} parent=1 // pred_check
      _
    $region3: #{dynamics_forward.1} parent=1 // pred_check_branch
      %21 = sbr.rel (0) target = $region5
    $region4: #{dynamics_forward.1} parent=1 // pred_region
      %s23 = ssub.s32 128, 128
      %24 = vsyncadd [#allocation3], %s23
      %s26 = sshll.u32 [#allocation2], 4
      %s27 = int_to_ptr.vmem [resolvable:$true] %s26
      %29 = dma.hbm_to_vmem [thread:$0]  %s0, 128, %s27, [#allocation3]
    $region5: #{dynamics_forward.1} parent=1 // pred_fallthru
      _
    // Predicated region
    $region6: #{dynamics_forward.1} parent=1 // pred_check
      _
    $region7: #{dynamics_forward.1} parent=1 // pred_check_branch
      %31 = sbr.rel (0) target = $region9
    $region8: #{dynamics_forward.1} parent=1 // pred_region
      %s33 = ssub.s32 128, 128
      %34 = vsyncadd [#allocation6], %s33
      %s36 = sshll.u32 [#allocation5], 4
      %s37 = int_to_ptr.vmem [resolvable:$true] %s36
      %39 = dma.hbm_to_vmem [thread:$0]  %s1, 128, %s37, [#allocation6]
    $region9: #{dynamics_forward.1} parent=1 // pred_fallthru
      _
    // Predicated region
    $region10: #{dynamics_forward.1} parent=1 // pred_check
      _
    $region11: #{dynamics_forward.1} parent=1 // pred_check_branch
      %41 = sbr.rel (0) target = $region13
    $region12: #{dynamics_forward.1} parent=1 // pred_region
      %s43 = ssub.s32 128, 128
      %44 = vsyncadd [#allocation6], %s43
      %s46 = sshll.u32 [#allocation7], 4
      %s47 = int_to_ptr.vmem [resolvable:$true] %s46
      %49 = dma.hbm_to_vmem [thread:$0]  %s2, 128, %s47, [#allocation6]
    $region13: #{dynamics_forward.1} parent=1 // pred_fallthru
      _
    // Predicated region
    $region14: #{dynamics_forward.1} parent=1 // pred_check
      _
    $region15: #{dynamics_forward.1} parent=1 // pred_check_branch
      %51 = sbr.rel (0) target = $region17
    $region16: #{dynamics_forward.1} parent=1 // pred_region
      %s53 = ssub.s32 5760, 5760
      %54 = vsyncadd [#allocation9], %s53
      %s55 = sshll.u32 [#allocation8], 4
      %s56 = int_to_ptr.vmem [resolvable:$true] %s55
      %61 = dma.hbm_to_vmem [thread:$0]  %s3, 5760, %s56, [#allocation9], 128, 128, 8
    $region17: #{dynamics_forward.1} parent=1 // pred_fallthru
      _
    // Predicated region
    $region18: #{dynamics_forward.1} parent=1 // pred_check
      _
    $region19: #{dynamics_forward.1} parent=1 // pred_check_branch
      %63 = sbr.rel (0) target = $region21
    $region20: #{dynamics_forward.1} parent=1 // pred_region
      %s65 = ssub.s32 6400, 6400
      %66 = vsyncadd [#allocation9], %s65
      %s67 = sshll.u32 [#allocation10], 4
      %s68 = int_to_ptr.vmem [resolvable:$true] %s67
      %73 = dma.hbm_to_vmem [thread:$0]  %s4, 6400, %s68, [#allocation9], 256, 256, 16
    $region21: #{dynamics_forward.1} parent=1 // pred_fallthru
      _
    // Predicated region
    $region22: #{dynamics_forward.1} parent=1 // pred_check
      _
    $region23: #{dynamics_forward.1} parent=1 // pred_check_branch
      %75 = sbr.rel (0) target = $region25
    $region24: #{dynamics_forward.1} parent=1 // pred_region
      %76 = dma.done [#allocation3], 128
    $region25: #{dynamics_forward.1} parent=1 // pred_fallthru
      _
    // Predicated region
    $region26: #{dynamics_forward.1} parent=1 // pred_check
      _
    $region27: #{dynamics_forward.1} parent=1 // pred_check_branch
      %78 = sbr.rel (0) target = $region29
    $region28: #{dynamics_forward.1} parent=1 // pred_region
      %79 = dma.done [#allocation6], 128
    $region29: #{dynamics_forward.1} parent=1 // pred_fallthru
      _
    // Predicated region
    $region30: #{dynamics_forward.1} parent=1 // pred_check
      _
    $region31: #{dynamics_forward.1} parent=1 // pred_check_branch
      %81 = sbr.rel (0) target = $region33
    $region32: #{dynamics_forward.1} parent=1 // pred_region
      %82 = dma.done [#allocation6], 128
    $region33: #{dynamics_forward.1} parent=1 // pred_fallthru
      _
    // Predicated region
    $region34: #{dynamics_forward.1} parent=1 // pred_check
      _
    $region35: #{dynamics_forward.1} parent=1 // pred_check_branch
      %84 = sbr.rel (0) target = $region37
    $region36: #{dynamics_forward.1} parent=1 // pred_region
      %85 = dma.done [#allocation9], 5760
    $region37: #{dynamics_forward.1} parent=1 // pred_fallthru
      _
    // Predicated region
    $region38: #{dynamics_forward.1} parent=1 // pred_check
      _
    $region39: #{dynamics_forward.1} parent=1 // pred_check_branch
      %87 = sbr.rel (0) target = $region41
    $region40: #{dynamics_forward.1} parent=1 // pred_region
      %88 = dma.done [#allocation9], 6400
    $region41: #{dynamics_forward.1} parent=1 // pred_fallthru
      _
    %v89 = vld [vmem:[#allocation5] sm:$0xff]
    %v90 = vld [vmem:[#allocation10 + $0x100] sm:$0xff]
    %v91 = vld [vmem:[#allocation10 + $0x108] sm:$0xff]
    %v92 = vld [vmem:[#allocation10 + $0x110] sm:$0xff]
    %v93 = vld [vmem:[#allocation10 + $0x118] sm:$0xff]
    %v94 = vld [vmem:[#allocation10 + $0x120] sm:$0xff]
    %v95 = vld [vmem:[#allocation10 + $0x128] sm:$0xff]
    %v96 = vld [vmem:[#allocation10 + $0x130] sm:$0xff]
    %v97 = vld [vmem:[#allocation10 + $0x138] sm:$0xff]
    %v98 = vld [vmem:[#allocation10 + $0x140] sm:$0xff]
    %v99 = vld [vmem:[#allocation10 + $0x148] sm:$0xff]
    %v100 = vld [vmem:[#allocation10 + $0x150] sm:$0xff]
    %v101 = vld [vmem:[#allocation10 + $0x158] sm:$0xff]
    %v102 = vld [vmem:[#allocation10 + $0x160] sm:$0xff]
    %v103 = vld [vmem:[#allocation10 + $0x168] sm:$0xff]
    %v104 = vld [vmem:[#allocation10 + $0x170] sm:$0xff]
    %v105 = vld [vmem:[#allocation10 + $0x178] sm:$0xff]
    %s106 = scalar_lea.vmem [#allocation10], 384
    %v107 = vld [vmem:[%s106] ss:$8 sm:$0x3]
    %v109 = vlaneseq
    %v110 = vshrl.u32 %v109, 7
    %v111 = vsub.s32 0, %v110
    %v112 = vrot.slane %v107, %v111
    %v113 = vlaneseq
    %v114 = vshrl.u32 %v113, 7
    %v115 = vsub.s32 1, %v114
    %v116 = vrot.slane %v107, %v115
    %vm119 = vcmask 523264
    %v121 = vsel %vm119, %v89, 0
    %123 = vmatprep.subr.mxu0 %v91
    %124 = vmatpush1.msra.mxu0 %v90
    %125 = vmatprep.subr.mxu0 %v93
    %126 = vmatpush1.msra.mxu0 %v92
    %127 = vmatprep.subr.mxu0 %v95
    %128 = vmatpush1.msra.mxu0 %v94
    %129 = vmatprep.subr.mxu0 %v97
    %130 = vmatpush1.msra.mxu0 %v96
    %131 = vmatprep.subr.mxu0 %v99
    %132 = vmatpush1.msra.mxu0 %v98
    %133 = vmatprep.subr.mxu0 %v101
    %134 = vmatpush1.msra.mxu0 %v100
    %135 = vmatprep.subr.mxu0 %v103
    %136 = vmatpush1.msra.mxu0 %v102
    %137 = vmatprep.subr.mxu0 %v105
    %138 = vmatpush1.msra.mxu0 %v104
    %139 = vmatprep.subr.mxu0 0.0
    %140 = vmatpush1.msra.mxu0 0.0
    %141 = vmatprep.subr.mxu0 0.0
    %142 = vmatpush1.msra.mxu0 0.0
    %143 = vmatprep.subr.mxu0 0.0
    %144 = vmatpush1.msra.mxu0 0.0
    %145 = vmatprep.subr.mxu0 0.0
    %146 = vmatpush1.msra.mxu0 0.0
    %147 = vmatprep.subr.mxu0 0.0
    %148 = vmatpush1.msra.mxu0 0.0
    %149 = vmatprep.subr.mxu0 0.0
    %150 = vmatpush1.msra.mxu0 0.0
    %151 = vmatprep.subr.mxu0 0.0
    %152 = vmatpush1.msra.mxu0 0.0
    %153 = vmatprep.subr.mxu0 0.0
    %154 = vmatpush1.msra.mxu0 0.0
    %155 = vmatprep.subr.mxu0 0.0
    %156 = vmatpush1.msra.mxu0 0.0
    %157 = vmatprep.subr.mxu0 0.0
    %158 = vmatpush1.msra.mxu0 0.0
    %159 = vmatprep.subr.mxu0 0.0
    %160 = vmatpush1.msra.mxu0 0.0
    %161 = vmatprep.subr.mxu0 0.0
    %162 = vmatpush1.msra.mxu0 0.0
    %163 = vmatprep.subr.mxu0 0.0
    %164 = vmatpush1.msra.mxu0 0.0
    %165 = vmatprep.subr.mxu0 0.0
    %166 = vmatpush1.msra.mxu0 0.0
    %167 = vmatprep.subr.mxu0 0.0
    %168 = vmatpush1.msra.mxu0 0.0
    %169 = vmatprep.subr.mxu0 0.0
    %170 = vmatpush1.msra.mxu0 0.0
    %171 = vmatprep.subr.mxu0 0.0
    %172 = vmatpush1.msra.mxu0 0.0
    %173 = vmatprep.subr.mxu0 0.0
    %174 = vmatpush1.msra.mxu0 0.0
    %175 = vmatprep.subr.mxu0 0.0
    %176 = vmatpush1.msra.mxu0 0.0
    %177 = vmatprep.subr.mxu0 0.0
    %178 = vmatpush1.msra.mxu0 0.0
    %179 = vmatprep.subr.mxu0 0.0
    %180 = vmatpush1.msra.mxu0 0.0
    %181 = vmatprep.subr.mxu0 0.0
    %182 = vmatpush1.msra.mxu0 0.0
    %183 = vmatprep.subr.mxu0 0.0
    %184 = vmatpush1.msra.mxu0 0.0
    %185 = vmatprep.subr.mxu0 0.0
    %186 = vmatpush1.msra.mxu0 0.0
    %187 = vmatprep.mubr.f32.mxu0 0.0
    %188 = vmatmul.mubr.f32.gmra.mrb[0].mxu0 %v121
    %v189 = vpop.f32.mrb[0].mxu0
    %v190 = vadd.f32 %v112, %v189
    %v191 = vpop.f32.mrb[0].mxu0
    %v192 = vadd.f32 %v116, %v191
    %193 = vdwg.mxu0
    %v194 = vld [vmem:[#allocation8 + $0x160] sm:$0xff]
    %v195 = vld [vmem:[#allocation2] sm:$0xff]
    %v196 = vld [vmem:[#allocation8] sm:$0xff]
    %v197 = vld [vmem:[#allocation8 + $0x8] sm:$0xff]
    %v198 = vld [vmem:[#allocation8 + $0x10] sm:$0xff]
    %v199 = vld [vmem:[#allocation8 + $0x18] sm:$0xff]
    %vm200 = vcmask 261120
    %v202 = vsel %vm200, %v195, 0
    %204 = vmatprep.subr.mxu0 0.0
    %205 = vmatpush1.msra.mxu0 %v196
    %206 = vmatprep.subr.mxu0 0.0
    %207 = vmatpush1.msra.mxu0 %v197
    %208 = vmatprep.subr.mxu0 0.0
    %209 = vmatpush1.msra.mxu0 %v198
    %210 = vmatprep.subr.mxu0 0.0
    %211 = vmatpush1.msra.mxu0 %v199
    %212 = vmatprep.subr.mxu0 0.0
    %213 = vmatpush1.msra.mxu0 0.0
    %214 = vmatprep.subr.mxu0 0.0
    %215 = vmatpush1.msra.mxu0 0.0
    %216 = vmatprep.subr.mxu0 0.0
    %217 = vmatpush1.msra.mxu0 0.0
    %218 = vmatprep.subr.mxu0 0.0
    %219 = vmatpush1.msra.mxu0 0.0
    %220 = vmatprep.subr.mxu0 0.0
    %221 = vmatpush1.msra.mxu0 0.0
    %222 = vmatprep.subr.mxu0 0.0
    %223 = vmatpush1.msra.mxu0 0.0
    %224 = vmatprep.subr.mxu0 0.0
    %225 = vmatpush1.msra.mxu0 0.0
    %226 = vmatprep.subr.mxu0 0.0
    %227 = vmatpush1.msra.mxu0 0.0
    %228 = vmatprep.subr.mxu0 0.0
    %229 = vmatpush1.msra.mxu0 0.0
    %230 = vmatprep.subr.mxu0 0.0
    %231 = vmatpush1.msra.mxu0 0.0
    %232 = vmatprep.subr.mxu0 0.0
    %233 = vmatpush1.msra.mxu0 0.0
    %234 = vmatprep.subr.mxu0 0.0
    %235 = vmatpush1.msra.mxu0 0.0
    %236 = vmatprep.subr.mxu0 0.0
    %237 = vmatpush1.msra.mxu0 0.0
    %238 = vmatprep.subr.mxu0 0.0
    %239 = vmatpush1.msra.mxu0 0.0
    %240 = vmatprep.subr.mxu0 0.0
    %241 = vmatpush1.msra.mxu0 0.0
    %242 = vmatprep.subr.mxu0 0.0
    %243 = vmatpush1.msra.mxu0 0.0
    %244 = vmatprep.subr.mxu0 0.0
    %245 = vmatpush1.msra.mxu0 0.0
    %246 = vmatprep.subr.mxu0 0.0
    %247 = vmatpush1.msra.mxu0 0.0
    %248 = vmatprep.subr.mxu0 0.0
    %249 = vmatpush1.msra.mxu0 0.0
    %250 = vmatprep.subr.mxu0 0.0
    %251 = vmatpush1.msra.mxu0 0.0
    %252 = vmatprep.subr.mxu0 0.0
    %253 = vmatpush1.msra.mxu0 0.0
    %254 = vmatprep.subr.mxu0 0.0
    %255 = vmatpush1.msra.mxu0 0.0
    %256 = vmatprep.subr.mxu0 0.0
    %257 = vmatpush1.msra.mxu0 0.0
    %258 = vmatprep.subr.mxu0 0.0
    %259 = vmatpush1.msra.mxu0 0.0
    %260 = vmatprep.subr.mxu0 0.0
    %261 = vmatpush1.msra.mxu0 0.0
    %262 = vmatprep.subr.mxu0 0.0
    %263 = vmatpush1.msra.mxu0 0.0
    %264 = vmatprep.subr.mxu0 0.0
    %265 = vmatpush1.msra.mxu0 0.0
    %266 = vmatprep.subr.mxu0 0.0
    %267 = vmatpush1.msra.mxu0 0.0
    %268 = vmatprep.mubr.f32.mxu0 0.0
    %269 = vmatmul.mubr.f32.gmra.mrb[0].mxu0 %v202
    %v270 = vpop.f32.mrb[0].mxu0
    %v271 = vadd.f32 0.0, %v270
    %v272 = vpop.f32.mrb[0].mxu0
    %273 = vdwg.mxu0
    %v274 = vrot.slane %v271, 4
    %v275 = vadd.f32 %v271, %v274
    %v276 = vrot.slane %v275, 2
    %v277 = vadd.f32 %v275, %v276
    %v278 = vrot.slane %v277, 1
    %v279 = vadd.f32 %v277, %v278
    %v280 = vrcp.pop 8.0
    %v281 = vmul.f32 %v279, %v280
    %v282 = vmul.f32 %v271, %v271
    %v283 = vrot.slane %v282, 4
    %v284 = vadd.f32 %v282, %v283
    %v285 = vrot.slane %v284, 2
    %v286 = vadd.f32 %v284, %v285
    %v287 = vrot.slane %v286, 1
    %v288 = vadd.f32 %v286, %v287
    %v289 = vmul.f32 %v288, %v280
    %v290 = vmul.f32 %v281, %v281
    %v291 = vsub.f32 %v289, %v290
    %v292 = vmax.f32 %v291, 0.0
    %v293 = vadd.f32 %v292, 1e-05
    %v294 = vrsqrt.pop %v293
    %v295 = vmul.f32 %v194, %v294
    %v296 = vmul.f32 %v281, %v295
    %v298 = vrot.slane %v296, 7
    %v300 = vsub.f32 %v194, %v298
    %v301 = vlaneseq
    %v302 = vshrl.u32 %v301, 7
    %v303 = vsub.s32 0, %v302
    %v304 = vrot.slane %v295, %v303
    %v305 = vmul.f32 %v271, %v304
    %v306 = vlaneseq
    %v307 = vshrl.u32 %v306, 7
    %v308 = vsub.s32 1, %v307
    %v309 = vrot.slane %v300, %v308
    %v310 = vadd.f32 %v305, %v309
    %v311 = vmax.f32 %v310, 0.0
    %v312 = vld [vmem:[#allocation8 + $0x20] sm:$0xff]
    %v313 = vld [vmem:[#allocation8 + $0x28] sm:$0xff]
    %v314 = vld [vmem:[#allocation8 + $0x30] sm:$0xff]
    %v315 = vld [vmem:[#allocation8 + $0x38] sm:$0xff]
    %v316 = vld [vmem:[#allocation8 + $0x40] sm:$0xff]
    %v317 = vld [vmem:[#allocation8 + $0x48] sm:$0xff]
    %v318 = vld [vmem:[#allocation8 + $0x50] sm:$0xff]
    %v319 = vld [vmem:[#allocation8 + $0x58] sm:$0xff]
    %v320 = vld [vmem:[#allocation8 + $0x60] sm:$0xff]
    %v321 = vld [vmem:[#allocation8 + $0x68] sm:$0xff]
    %v322 = vld [vmem:[#allocation8 + $0x70] sm:$0xff]
    %v323 = vld [vmem:[#allocation8 + $0x78] sm:$0xff]
    %v324 = vld [vmem:[#allocation8 + $0x80] sm:$0xff]
    %v325 = vld [vmem:[#allocation8 + $0x88] sm:$0xff]
    %v326 = vld [vmem:[#allocation8 + $0x90] sm:$0xff]
    %v327 = vld [vmem:[#allocation8 + $0x98] sm:$0xff]
    %328 = vmatprep.subr.mxu0 0.0
    %329 = vmatpush1.msra.mxu0 %v312
    %330 = vmatprep.subr.mxu0 0.0
    %331 = vmatpush1.msra.mxu0 %v313
    %332 = vmatprep.subr.mxu0 0.0
    %333 = vmatpush1.msra.mxu0 %v314
    %334 = vmatprep.subr.mxu0 0.0
    %335 = vmatpush1.msra.mxu0 %v315
    %336 = vmatprep.subr.mxu0 0.0
    %337 = vmatpush1.msra.mxu0 %v316
    %338 = vmatprep.subr.mxu0 0.0
    %339 = vmatpush1.msra.mxu0 %v317
    %340 = vmatprep.subr.mxu0 0.0
    %341 = vmatpush1.msra.mxu0 %v318
    %342 = vmatprep.subr.mxu0 0.0
    %343 = vmatpush1.msra.mxu0 %v319
    %344 = vmatprep.subr.mxu0 0.0
    %345 = vmatpush1.msra.mxu0 %v320
    %346 = vmatprep.subr.mxu0 0.0
    %347 = vmatpush1.msra.mxu0 %v321
    %348 = vmatprep.subr.mxu0 0.0
    %349 = vmatpush1.msra.mxu0 %v322
    %350 = vmatprep.subr.mxu0 0.0
    %351 = vmatpush1.msra.mxu0 %v323
    %352 = vmatprep.subr.mxu0 0.0
    %353 = vmatpush1.msra.mxu0 %v324
    %354 = vmatprep.subr.mxu0 0.0
    %355 = vmatpush1.msra.mxu0 %v325
    %356 = vmatprep.subr.mxu0 0.0
    %357 = vmatpush1.msra.mxu0 %v326
    %358 = vmatprep.subr.mxu0 0.0
    %359 = vmatpush1.msra.mxu0 %v327
    %360 = vmatprep.subr.mxu0 0.0
    %361 = vmatpush1.msra.mxu0 0.0
    %362 = vmatprep.subr.mxu0 0.0
    %363 = vmatpush1.msra.mxu0 0.0
    %364 = vmatprep.subr.mxu0 0.0
    %365 = vmatpush1.msra.mxu0 0.0
    %366 = vmatprep.subr.mxu0 0.0
    %367 = vmatpush1.msra.mxu0 0.0
    %368 = vmatprep.subr.mxu0 0.0
    %369 = vmatpush1.msra.mxu0 0.0
    %370 = vmatprep.subr.mxu0 0.0
    %371 = vmatpush1.msra.mxu0 0.0
    %372 = vmatprep.subr.mxu0 0.0
    %373 = vmatpush1.msra.mxu0 0.0
    %374 = vmatprep.subr.mxu0 0.0
    %375 = vmatpush1.msra.mxu0 0.0
    %376 = vmatprep.subr.mxu0 0.0
    %377 = vmatpush1.msra.mxu0 0.0
    %378 = vmatprep.subr.mxu0 0.0
    %379 = vmatpush1.msra.mxu0 0.0
    %380 = vmatprep.subr.mxu0 0.0
    %381 = vmatpush1.msra.mxu0 0.0
    %382 = vmatprep.subr.mxu0 0.0
    %383 = vmatpush1.msra.mxu0 0.0
    %384 = vmatprep.subr.mxu0 0.0
    %385 = vmatpush1.msra.mxu0 0.0
    %386 = vmatprep.subr.mxu0 0.0
    %387 = vmatpush1.msra.mxu0 0.0
    %388 = vmatprep.subr.mxu0 0.0
    %389 = vmatpush1.msra.mxu0 0.0
    %390 = vmatprep.subr.mxu0 0.0
    %391 = vmatpush1.msra.mxu0 0.0
    %392 = vmatprep.mubr.f32.mxu0 0.0
    %393 = vmatmul.mubr.f32.gmra.mrb[0].mxu0 %v311
    %v394 = vpop.f32.mrb[0].mxu0
    %v395 = vadd.f32 0.0, %v394
    %v396 = vpop.f32.mrb[0].mxu0
    %397 = vdwg.mxu0
    %v398 = vrot.slane %v395, 4
    %v399 = vadd.f32 %v395, %v398
    %v400 = vrot.slane %v399, 2
    %v401 = vadd.f32 %v399, %v400
    %v402 = vrot.slane %v401, 1
    %v403 = vadd.f32 %v401, %v402
    %v404 = vmul.f32 %v403, %v280
    %v405 = vmul.f32 %v395, %v395
    %v406 = vrot.slane %v405, 4
    %v407 = vadd.f32 %v405, %v406
    %v408 = vrot.slane %v407, 2
    %v409 = vadd.f32 %v407, %v408
    %v410 = vrot.slane %v409, 1
    %v411 = vadd.f32 %v409, %v410
    %v412 = vmul.f32 %v411, %v280
    %v413 = vmul.f32 %v404, %v404
    %v414 = vsub.f32 %v412, %v413
    %v415 = vmax.f32 %v414, 0.0
    %v416 = vadd.f32 %v415, 1e-05
    %v417 = vrsqrt.pop %v416
    %v418 = vmul.f32 %v194, %v417
    %v419 = vmul.f32 %v404, %v418
    %v421 = vrot.slane %v419, 7
    %v423 = vsub.f32 %v194, %v421
    %v424 = vlaneseq
    %v425 = vshrl.u32 %v424, 7
    %v426 = vsub.s32 2, %v425
    %v427 = vrot.slane %v418, %v426
    %v428 = vmul.f32 %v395, %v427
    %v429 = vlaneseq
    %v430 = vshrl.u32 %v429, 7
    %v431 = vsub.s32 3, %v430
    %v432 = vrot.slane %v423, %v431
    %v433 = vadd.f32 %v428, %v432
    %v434 = vld [vmem:[#allocation10] sm:$0xff]
    %v435 = vld [vmem:[#allocation10 + $0x8] sm:$0xff]
    %v436 = vld [vmem:[#allocation10 + $0x10] sm:$0xff]
    %v437 = vld [vmem:[#allocation10 + $0x18] sm:$0xff]
    %v438 = vld [vmem:[#allocation10 + $0x20] sm:$0xff]
    %v439 = vld [vmem:[#allocation10 + $0x28] sm:$0xff]
    %v440 = vld [vmem:[#allocation10 + $0x30] sm:$0xff]
    %v441 = vld [vmem:[#allocation10 + $0x38] sm:$0xff]
    %v442 = vld [vmem:[#allocation10 + $0x40] sm:$0xff]
    %v443 = vld [vmem:[#allocation10 + $0x48] sm:$0xff]
    %v444 = vld [vmem:[#allocation10 + $0x50] sm:$0xff]
    %v445 = vld [vmem:[#allocation10 + $0x58] sm:$0xff]
    %v446 = vld [vmem:[#allocation10 + $0x60] sm:$0xff]
    %v447 = vld [vmem:[#allocation10 + $0x68] sm:$0xff]
    %v448 = vld [vmem:[#allocation10 + $0x70] sm:$0xff]
    %v449 = vld [vmem:[#allocation10 + $0x78] sm:$0xff]
    %v450 = vld [vmem:[#allocation10 + $0x80] sm:$0xff]
    %v451 = vld [vmem:[#allocation10 + $0x88] sm:$0xff]
    %v452 = vld [vmem:[#allocation10 + $0x90] sm:$0xff]
    %v453 = vld [vmem:[#allocation10 + $0x98] sm:$0xff]
    %v454 = vld [vmem:[#allocation10 + $0xa0] sm:$0xff]
    %v455 = vld [vmem:[#allocation10 + $0xa8] sm:$0xff]
    %v456 = vld [vmem:[#allocation10 + $0xb0] sm:$0xff]
    %v457 = vld [vmem:[#allocation10 + $0xb8] sm:$0xff]
    %v458 = vld [vmem:[#allocation10 + $0xc0] sm:$0xff]
    %v459 = vld [vmem:[#allocation10 + $0xc8] sm:$0xff]
    %v460 = vld [vmem:[#allocation10 + $0xd0] sm:$0xff]
    %v461 = vld [vmem:[#allocation10 + $0xd8] sm:$0xff]
    %v462 = vld [vmem:[#allocation10 + $0xe0] sm:$0xff]
    %v463 = vld [vmem:[#allocation10 + $0xe8] sm:$0xff]
    %v464 = vld [vmem:[#allocation10 + $0xf0] sm:$0xff]
    %v465 = vld [vmem:[#allocation10 + $0xf8] sm:$0xff]
    %466 = vmatprep.subr.mxu0 %v435
    %467 = vmatpush1.msra.mxu0 %v434
    %468 = vmatprep.subr.mxu0 %v437
    %469 = vmatpush1.msra.mxu0 %v436
    %470 = vmatprep.subr.mxu0 %v439
    %471 = vmatpush1.msra.mxu0 %v438
    %472 = vmatprep.subr.mxu0 %v441
    %473 = vmatpush1.msra.mxu0 %v440
    %474 = vmatprep.subr.mxu0 %v443
    %475 = vmatpush1.msra.mxu0 %v442
    %476 = vmatprep.subr.mxu0 %v445
    %477 = vmatpush1.msra.mxu0 %v444
    %478 = vmatprep.subr.mxu0 %v447
    %479 = vmatpush1.msra.mxu0 %v446
    %480 = vmatprep.subr.mxu0 %v449
    %481 = vmatpush1.msra.mxu0 %v448
    %482 = vmatprep.subr.mxu0 %v451
    %483 = vmatpush1.msra.mxu0 %v450
    %484 = vmatprep.subr.mxu0 %v453
    %485 = vmatpush1.msra.mxu0 %v452
    %486 = vmatprep.subr.mxu0 %v455
    %487 = vmatpush1.msra.mxu0 %v454
    %488 = vmatprep.subr.mxu0 %v457
    %489 = vmatpush1.msra.mxu0 %v456
    %490 = vmatprep.subr.mxu0 %v459
    %491 = vmatpush1.msra.mxu0 %v458
    %492 = vmatprep.subr.mxu0 %v461
    %493 = vmatpush1.msra.mxu0 %v460
    %494 = vmatprep.subr.mxu0 %v463
    %495 = vmatpush1.msra.mxu0 %v462
    %496 = vmatprep.subr.mxu0 %v465
    %497 = vmatpush1.msra.mxu0 %v464
    %498 = vmatprep.subr.mxu0 0.0
    %499 = vmatpush1.msra.mxu0 0.0
    %500 = vmatprep.subr.mxu0 0.0
    %501 = vmatpush1.msra.mxu0 0.0
    %502 = vmatprep.subr.mxu0 0.0
    %503 = vmatpush1.msra.mxu0 0.0
    %504 = vmatprep.subr.mxu0 0.0
    %505 = vmatpush1.msra.mxu0 0.0
    %506 = vmatprep.subr.mxu0 0.0
    %507 = vmatpush1.msra.mxu0 0.0
    %508 = vmatprep.subr.mxu0 0.0
    %509 = vmatpush1.msra.mxu0 0.0
    %510 = vmatprep.subr.mxu0 0.0
    %511 = vmatpush1.msra.mxu0 0.0
    %512 = vmatprep.subr.mxu0 0.0
    %513 = vmatpush1.msra.mxu0 0.0
    %514 = vmatprep.subr.mxu0 0.0
    %515 = vmatpush1.msra.mxu0 0.0
    %516 = vmatprep.subr.mxu0 0.0
    %517 = vmatpush1.msra.mxu0 0.0
    %518 = vmatprep.subr.mxu0 0.0
    %519 = vmatpush1.msra.mxu0 0.0
    %520 = vmatprep.subr.mxu0 0.0
    %521 = vmatpush1.msra.mxu0 0.0
    %522 = vmatprep.subr.mxu0 0.0
    %523 = vmatpush1.msra.mxu0 0.0
    %524 = vmatprep.subr.mxu0 0.0
    %525 = vmatpush1.msra.mxu0 0.0
    %526 = vmatprep.subr.mxu0 0.0
    %527 = vmatpush1.msra.mxu0 0.0
    %528 = vmatprep.subr.mxu0 0.0
    %529 = vmatpush1.msra.mxu0 0.0
    %530 = vmatprep.mubr.f32.mxu0 0.0
    %531 = vmatmul.mubr.f32.gmra.mrb[0].mxu0 %v433
    %v532 = vpop.f32.mrb[0].mxu0
    %v533 = vadd.f32 %v190, %v532
    %v534 = vpop.f32.mrb[0].mxu0
    %v535 = vadd.f32 %v192, %v534
    %536 = vdwg.mxu0
    %v537 = vxor.u32 %v533, 2147483648
    %v538 = vxor.u32 %v535, 2147483648
    %v539 = vmul.f32 %v537, 1.442695
    %v540 = vpow.pop %v539
    %v541 = vmul.f32 %v538, 1.442695
    %v542 = vpow.pop %v541
    %v543 = vadd.f32 %v540, 1.0
    %v544 = vadd.f32 %v542, 1.0
    %v545 = vrcp.pop %v543
    %v546 = vmul.f32 1.0, %v545
    %v547 = vrcp.pop %v544
    %v548 = vmul.f32 1.0, %v547
    %v549 = vmul.f32 %v548, 2.0
    %v550 = vsub.f32 %v549, 1.0
    %v551 = vld [vmem:[#allocation7] sm:$0xff]
    %553 = vrot.lane.b32.xlu0 %v551, 64
    %v554 = vpop.permute.xlu0 %553
    %v556 = vmul.f32 %v546, %v554
    %v557 = vmul.f32 %v546, %v550
    %559 = vrot.lane.b32.xlu0 %v557, 64
    %v560 = vpop.permute.xlu0 %559
    %v562 = vadd.f32 %v556, %v560
    %v563 = vtanh.pop %v562
    %v564 = vmul.f32 %v548, %v563
    %v565 = vld [vmem:[#allocation8 + $0xa0] sm:$0xff]
    %v566 = vld [vmem:[#allocation8 + $0xa8] sm:$0xff]
    %v567 = vld [vmem:[#allocation8 + $0xb0] sm:$0xff]
    %v568 = vld [vmem:[#allocation8 + $0xb8] sm:$0xff]
    %v569 = vld [vmem:[#allocation8 + $0xc0] sm:$0xff]
    %v570 = vld [vmem:[#allocation8 + $0xc8] sm:$0xff]
    %v571 = vld [vmem:[#allocation8 + $0xd0] sm:$0xff]
    %v572 = vld [vmem:[#allocation8 + $0xd8] sm:$0xff]
    %574 = vrot.lane.b32.xlu0 %v564, 64
    %v575 = vpop.permute.xlu0 %574
    %v576 = vsel %vm119, %v575, 0
    %578 = vmatprep.subr.mxu0 0.0
    %579 = vmatpush1.msra.mxu0 %v565
    %580 = vmatprep.subr.mxu0 0.0
    %581 = vmatpush1.msra.mxu0 %v566
    %582 = vmatprep.subr.mxu0 0.0
    %583 = vmatpush1.msra.mxu0 %v567
    %584 = vmatprep.subr.mxu0 0.0
    %585 = vmatpush1.msra.mxu0 %v568
    %586 = vmatprep.subr.mxu0 0.0
    %587 = vmatpush1.msra.mxu0 %v569
    %588 = vmatprep.subr.mxu0 0.0
    %589 = vmatpush1.msra.mxu0 %v570
    %590 = vmatprep.subr.mxu0 0.0
    %591 = vmatpush1.msra.mxu0 %v571
    %592 = vmatprep.subr.mxu0 0.0
    %593 = vmatpush1.msra.mxu0 %v572
    %594 = vmatprep.subr.mxu0 0.0
    %595 = vmatpush1.msra.mxu0 0.0
    %596 = vmatprep.subr.mxu0 0.0
    %597 = vmatpush1.msra.mxu0 0.0
    %598 = vmatprep.subr.mxu0 0.0
    %599 = vmatpush1.msra.mxu0 0.0
    %600 = vmatprep.subr.mxu0 0.0
    %601 = vmatpush1.msra.mxu0 0.0
    %602 = vmatprep.subr.mxu0 0.0
    %603 = vmatpush1.msra.mxu0 0.0
    %604 = vmatprep.subr.mxu0 0.0
    %605 = vmatpush1.msra.mxu0 0.0
    %606 = vmatprep.subr.mxu0 0.0
    %607 = vmatpush1.msra.mxu0 0.0
    %608 = vmatprep.subr.mxu0 0.0
    %609 = vmatpush1.msra.mxu0 0.0
    %610 = vmatprep.subr.mxu0 0.0
    %611 = vmatpush1.msra.mxu0 0.0
    %612 = vmatprep.subr.mxu0 0.0
    %613 = vmatpush1.msra.mxu0 0.0
    %614 = vmatprep.subr.mxu0 0.0
    %615 = vmatpush1.msra.mxu0 0.0
    %616 = vmatprep.subr.mxu0 0.0
    %617 = vmatpush1.msra.mxu0 0.0
    %618 = vmatprep.subr.mxu0 0.0
    %619 = vmatpush1.msra.mxu0 0.0
    %620 = vmatprep.subr.mxu0 0.0
    %621 = vmatpush1.msra.mxu0 0.0
    %622 = vmatprep.subr.mxu0 0.0
    %623 = vmatpush1.msra.mxu0 0.0
    %624 = vmatprep.subr.mxu0 0.0
    %625 = vmatpush1.msra.mxu0 0.0
    %626 = vmatprep.subr.mxu0 0.0
    %627 = vmatpush1.msra.mxu0 0.0
    %628 = vmatprep.subr.mxu0 0.0
    %629 = vmatpush1.msra.mxu0 0.0
    %630 = vmatprep.subr.mxu0 0.0
    %631 = vmatpush1.msra.mxu0 0.0
    %632 = vmatprep.subr.mxu0 0.0
    %633 = vmatpush1.msra.mxu0 0.0
    %634 = vmatprep.subr.mxu0 0.0
    %635 = vmatpush1.msra.mxu0 0.0
    %636 = vmatprep.subr.mxu0 0.0
    %637 = vmatpush1.msra.mxu0 0.0
    %638 = vmatprep.subr.mxu0 0.0
    %639 = vmatpush1.msra.mxu0 0.0
    %640 = vmatprep.subr.mxu0 0.0
    %641 = vmatpush1.msra.mxu0 0.0
    %642 = vmatprep.mubr.f32.mxu0 0.0
    %643 = vmatmul.mubr.f32.gmra.mrb[0].mxu0 %v576
    %v644 = vpop.f32.mrb[0].mxu0
    %v645 = vadd.f32 0.0, %v644
    %v646 = vpop.f32.mrb[0].mxu0
    %647 = vdwg.mxu0
    %v648 = vrot.slane %v645, 4
    %v649 = vadd.f32 %v645, %v648
    %v650 = vrot.slane %v649, 2
    %v651 = vadd.f32 %v649, %v650
    %v652 = vrot.slane %v651, 1
    %v653 = vadd.f32 %v651, %v652
    %v654 = vmul.f32 %v653, %v280
    %v655 = vmul.f32 %v645, %v645
    %v656 = vrot.slane %v655, 4
    %v657 = vadd.f32 %v655, %v656
    %v658 = vrot.slane %v657, 2
    %v659 = vadd.f32 %v657, %v658
    %v660 = vrot.slane %v659, 1
    %v661 = vadd.f32 %v659, %v660
    %v662 = vmul.f32 %v661, %v280
    %v663 = vmul.f32 %v654, %v654
    %v664 = vsub.f32 %v662, %v663
    %v665 = vmax.f32 %v664, 0.0
    %v666 = vadd.f32 %v665, 1e-05
    %v667 = vrsqrt.pop %v666
    %v668 = vmul.f32 %v194, %v667
    %v669 = vmul.f32 %v654, %v668
    %v671 = vrot.slane %v669, 7
    %v673 = vsub.f32 %v194, %v671
    %v674 = vlaneseq
    %v675 = vshrl.u32 %v674, 7
    %v676 = vsub.s32 4, %v675
    %v677 = vrot.slane %v668, %v676
    %v678 = vmul.f32 %v645, %v677
    %v679 = vlaneseq
    %v680 = vshrl.u32 %v679, 7
    %v681 = vsub.s32 5, %v680
    %v682 = vrot.slane %v673, %v681
    %v683 = vadd.f32 %v678, %v682
    %v684 = vmax.f32 %v683, 0.0
    %v685 = vld [vmem:[#allocation8 + $0xe0] sm:$0xff]
    %v686 = vld [vmem:[#allocation8 + $0xe8] sm:$0xff]
    %v687 = vld [vmem:[#allocation8 + $0xf0] sm:$0xff]
    %v688 = vld [vmem:[#allocation8 + $0xf8] sm:$0xff]
    %v689 = vld [vmem:[#allocation8 + $0x100] sm:$0xff]
    %v690 = vld [vmem:[#allocation8 + $0x108] sm:$0xff]
    %v691 = vld [vmem:[#allocation8 + $0x110] sm:$0xff]
    %v692 = vld [vmem:[#allocation8 + $0x118] sm:$0xff]
    %v693 = vld [vmem:[#allocation8 + $0x120] sm:$0xff]
    %v694 = vld [vmem:[#allocation8 + $0x128] sm:$0xff]
    %v695 = vld [vmem:[#allocation8 + $0x130] sm:$0xff]
    %v696 = vld [vmem:[#allocation8 + $0x138] sm:$0xff]
    %v697 = vld [vmem:[#allocation8 + $0x140] sm:$0xff]
    %v698 = vld [vmem:[#allocation8 + $0x148] sm:$0xff]
    %v699 = vld [vmem:[#allocation8 + $0x150] sm:$0xff]
    %v700 = vld [vmem:[#allocation8 + $0x158] sm:$0xff]
    %701 = vmatprep.subr.mxu0 0.0
    %702 = vmatpush1.msra.mxu0 %v685
    %703 = vmatprep.subr.mxu0 0.0
    %704 = vmatpush1.msra.mxu0 %v686
    %705 = vmatprep.subr.mxu0 0.0
    %706 = vmatpush1.msra.mxu0 %v687
    %707 = vmatprep.subr.mxu0 0.0
    %708 = vmatpush1.msra.mxu0 %v688
    %709 = vmatprep.subr.mxu0 0.0
    %710 = vmatpush1.msra.mxu0 %v689
    %711 = vmatprep.subr.mxu0 0.0
    %712 = vmatpush1.msra.mxu0 %v690
    %713 = vmatprep.subr.mxu0 0.0
    %714 = vmatpush1.msra.mxu0 %v691
    %715 = vmatprep.subr.mxu0 0.0
    %716 = vmatpush1.msra.mxu0 %v692
    %717 = vmatprep.subr.mxu0 0.0
    %718 = vmatpush1.msra.mxu0 %v693
    %719 = vmatprep.subr.mxu0 0.0
    %720 = vmatpush1.msra.mxu0 %v694
    %721 = vmatprep.subr.mxu0 0.0
    %722 = vmatpush1.msra.mxu0 %v695
    %723 = vmatprep.subr.mxu0 0.0
    %724 = vmatpush1.msra.mxu0 %v696
    %725 = vmatprep.subr.mxu0 0.0
    %726 = vmatpush1.msra.mxu0 %v697
    %727 = vmatprep.subr.mxu0 0.0
    %728 = vmatpush1.msra.mxu0 %v698
    %729 = vmatprep.subr.mxu0 0.0
    %730 = vmatpush1.msra.mxu0 %v699
    %731 = vmatprep.subr.mxu0 0.0
    %732 = vmatpush1.msra.mxu0 %v700
    %733 = vmatprep.subr.mxu0 0.0
    %734 = vmatpush1.msra.mxu0 0.0
    %735 = vmatprep.subr.mxu0 0.0
    %736 = vmatpush1.msra.mxu0 0.0
    %737 = vmatprep.subr.mxu0 0.0
    %738 = vmatpush1.msra.mxu0 0.0
    %739 = vmatprep.subr.mxu0 0.0
    %740 = vmatpush1.msra.mxu0 0.0
    %741 = vmatprep.subr.mxu0 0.0
    %742 = vmatpush1.msra.mxu0 0.0
    %743 = vmatprep.subr.mxu0 0.0
    %744 = vmatpush1.msra.mxu0 0.0
    %745 = vmatprep.subr.mxu0 0.0
    %746 = vmatpush1.msra.mxu0 0.0
    %747 = vmatprep.subr.mxu0 0.0
    %748 = vmatpush1.msra.mxu0 0.0
    %749 = vmatprep.subr.mxu0 0.0
    %750 = vmatpush1.msra.mxu0 0.0
    %751 = vmatprep.subr.mxu0 0.0
    %752 = vmatpush1.msra.mxu0 0.0
    %753 = vmatprep.subr.mxu0 0.0
    %754 = vmatpush1.msra.mxu0 0.0
    %755 = vmatprep.subr.mxu0 0.0
    %756 = vmatpush1.msra.mxu0 0.0
    %757 = vmatprep.subr.mxu0 0.0
    %758 = vmatpush1.msra.mxu0 0.0
    %759 = vmatprep.subr.mxu0 0.0
    %760 = vmatpush1.msra.mxu0 0.0
    %761 = vmatprep.subr.mxu0 0.0
    %762 = vmatpush1.msra.mxu0 0.0
    %763 = vmatprep.subr.mxu0 0.0
    %764 = vmatpush1.msra.mxu0 0.0
    %765 = vmatprep.mubr.f32.mxu0 0.0
    %766 = vmatmul.mubr.f32.gmra.mrb[0].mxu0 %v684
    %v767 = vpop.f32.mrb[0].mxu0
    %v768 = vadd.f32 0.0, %v767
    %v769 = vpop.f32.mrb[0].mxu0
    %770 = vdwg.mxu0
    %v771 = vrot.slane %v768, 4
    %v772 = vadd.f32 %v768, %v771
    %v773 = vrot.slane %v772, 2
    %v774 = vadd.f32 %v772, %v773
    %v775 = vrot.slane %v774, 1
    %v776 = vadd.f32 %v774, %v775
    %v777 = vmul.f32 %v776, %v280
    %v778 = vmul.f32 %v768, %v768
    %v779 = vrot.slane %v778, 4
    %v780 = vadd.f32 %v778, %v779
    %v781 = vrot.slane %v780, 2
    %v782 = vadd.f32 %v780, %v781
    %v783 = vrot.slane %v782, 1
    %v784 = vadd.f32 %v782, %v783
    %v785 = vmul.f32 %v784, %v280
    %v786 = vmul.f32 %v777, %v777
    %v787 = vsub.f32 %v785, %v786
    %v788 = vmax.f32 %v787, 0.0
    %v789 = vadd.f32 %v788, 1e-05
    %v790 = vrsqrt.pop %v789
    %v791 = vmul.f32 %v194, %v790
    %v792 = vmul.f32 %v777, %v791
    %v794 = vrot.slane %v792, 7
    %v796 = vsub.f32 %v194, %v794
    %v797 = vlaneseq
    %v798 = vshrl.u32 %v797, 7
    %v799 = vsub.s32 6, %v798
    %v800 = vrot.slane %v791, %v799
    %v801 = vmul.f32 %v768, %v800
    %v802 = vlaneseq
    %v803 = vshrl.u32 %v802, 7
    %v804 = vsub.s32 7, %v803
    %v805 = vrot.slane %v796, %v804
    %v806 = vadd.f32 %v801, %v805
    %vm807 = vcmask 244736
    %808 = vst.msk [vmem:[#allocation11] sm:$0xff] %vm807, %v433
    %810 = vst.msk [vmem:[#allocation12] sm:$0xff] %vm119, %v575
    %812 = vrot.lane.b32.xlu0 %v562, 64
    %v813 = vpop.permute.xlu0 %812
    %815 = vst.msk [vmem:[#allocation14] sm:$0xff] %vm119, %v813
    %vm816 = vcmask 498688
    %817 = vst.msk [vmem:[#allocation15] sm:$0xff] %vm816, %v806
    // Predicated region
    $region42: #{dynamics_forward.1} parent=1 // pred_check
      _
    $region43: #{dynamics_forward.1} parent=1 // pred_check_branch
      %819 = sbr.rel (0) target = $region45
    $region44: #{dynamics_forward.1} parent=1 // pred_region
      %s821 = ssub.s32 128, 128
      %822 = vsyncadd [#allocation4], %s821
      %s824 = sshll.u32 [#allocation11], 4
      %s825 = int_to_ptr.vmem [resolvable:$true] %s824
      %827 = dma.vmem_to_hbm [thread:$0]  %s825, 128, %s5, [#allocation4]
    $region45: #{dynamics_forward.1} parent=1 // pred_fallthru
      _
    // Predicated region
    $region46: #{dynamics_forward.1} parent=1 // pred_check
      _
    $region47: #{dynamics_forward.1} parent=1 // pred_check_branch
      %829 = sbr.rel (0) target = $region49
    $region48: #{dynamics_forward.1} parent=1 // pred_region
      %s831 = ssub.s32 128, 128
      %832 = vsyncadd [#allocation13], %s831
      %s834 = sshll.u32 [#allocation12], 4
      %s835 = int_to_ptr.vmem [resolvable:$true] %s834
      %837 = dma.vmem_to_hbm [thread:$0]  %s835, 128, %s6, [#allocation13]
    $region49: #{dynamics_forward.1} parent=1 // pred_fallthru
      _
    // Predicated region
    $region50: #{dynamics_forward.1} parent=1 // pred_check
      _
    $region51: #{dynamics_forward.1} parent=1 // pred_check_branch
      %839 = sbr.rel (0) target = $region53
    $region52: #{dynamics_forward.1} parent=1 // pred_region
      %s841 = ssub.s32 128, 128
      %842 = vsyncadd [#allocation13], %s841
      %s844 = sshll.u32 [#allocation14], 4
      %s845 = int_to_ptr.vmem [resolvable:$true] %s844
      %847 = dma.vmem_to_hbm [thread:$0]  %s845, 128, %s7, [#allocation13]
    $region53: #{dynamics_forward.1} parent=1 // pred_fallthru
      _
    // Predicated region
    $region54: #{dynamics_forward.1} parent=1 // pred_check
      _
    $region55: #{dynamics_forward.1} parent=1 // pred_check_branch
      %849 = sbr.rel (0) target = $region57
    $region56: #{dynamics_forward.1} parent=1 // pred_region
      %s851 = ssub.s32 128, 128
      %852 = vsyncadd [#allocation16], %s851
      %s854 = sshll.u32 [#allocation15], 4
      %s855 = int_to_ptr.vmem [resolvable:$true] %s854
      %857 = dma.vmem_to_hbm [thread:$0]  %s855, 128, %s8, [#allocation16]
    $region57: #{dynamics_forward.1} parent=1 // pred_fallthru
      _
    // Predicated region
    $region58: #{dynamics_forward.1} parent=1 // pred_check
      _
    $region59: #{dynamics_forward.1} parent=1 // pred_check_branch
      %859 = sbr.rel (0) target = $region61
    $region60: #{dynamics_forward.1} parent=1 // pred_region
      %860 = dma.done [#allocation4], 128
    $region61: #{dynamics_forward.1} parent=1 // pred_fallthru
      _
    // Predicated region
    $region62: #{dynamics_forward.1} parent=1 // pred_check
      _
    $region63: #{dynamics_forward.1} parent=1 // pred_check_branch
      %862 = sbr.rel (0) target = $region65
    $region64: #{dynamics_forward.1} parent=1 // pred_region
      %863 = dma.done [#allocation13], 128
    $region65: #{dynamics_forward.1} parent=1 // pred_fallthru
      _
    // Predicated region
    $region66: #{dynamics_forward.1} parent=1 // pred_check
      _
    $region67: #{dynamics_forward.1} parent=1 // pred_check_branch
      %865 = sbr.rel (0) target = $region69
    $region68: #{dynamics_forward.1} parent=1 // pred_region
      %866 = dma.done [#allocation13], 128
    $region69: #{dynamics_forward.1} parent=1 // pred_fallthru
      _
    // Predicated region
    $region70: #{dynamics_forward.1} parent=1 // pred_check
      _
    $region71: #{dynamics_forward.1} parent=1 // pred_check_branch
      %868 = sbr.rel (0) target = $region73
    $region72: #{dynamics_forward.1} parent=1 // pred_region
      %869 = dma.done [#allocation16], 128
    $region73: #{dynamics_forward.1} parent=1 // pred_fallthru
      _
    %870 = vsyncpa [#allocation3], 1
    %871 = vsyncpa [#allocation6], 1
    %872 = vsyncpa [#allocation9], 1
    %873 = vsyncpa [#allocation4], 1
    %874 = vsyncpa [#allocation13], 1
    %875 = vsyncpa [#allocation16], 1

</llo_original>
